<compile_context>
chip_gen: v6e
topology: v6e:2x2x1
jax: 0.10.0
libtpu: 0.0.40
codegen_flags: <defaults>
</compile_context>

<pallas_src>
import functools

import numpy as np
import jax
import jax.numpy as jnp
from jax.experimental import pallas as pl
from jax.experimental.pallas import tpu as pltpu

TIME_WINDOW = 4      # T
THRESH = 0.5
DECAY = 0.25


# ----------------------------------------------------------------------------
# Small tiling helpers.
# ----------------------------------------------------------------------------
def _row_tile(rows, cap):
    """Largest row tile <= cap. Prefer exact divisors (multiple of 32 for packed dtypes);
    otherwise fall back to a multiple-of-32 tile with a cdiv grid (partial last block)."""
    if rows <= cap:
        return rows
    t = cap - (cap % 32)
    while t >= 32:
        if rows % t == 0:
            return t
        t -= 32
    return max(32, cap - (cap % 32))


def _largest_divisor(n, cap):
    d = 1
    for t in range(1, min(n, cap) + 1):
        if n % t == 0:
            d = t
    return d


# ----------------------------------------------------------------------------
# Kernel 1: fused (optional LayerNorm) + linear (conv1x1/Linear + folded BN) + LIF over T.
# ----------------------------------------------------------------------------
def _linear_lif_kernel(*refs, num_steps, thresh, decay, apply_ln, ln_eps):
    if apply_ln:
        x_ref, w_ref, b_ref, g_ref, bt_ref, o_ref = refs
    else:
        x_ref, w_ref, b_ref, o_ref = refs

    w = w_ref[...]                                   # (K, Cout) bf16, VMEM-resident across grid
    bias = b_ref[...].astype(jnp.float32)            # (1, Cout)

    mem = None
    spike = None
    for t in range(num_steps):                       # T small & static -> fully unrolled
        xt_raw = x_ref[t]                            # (tm, K)
        if apply_ln:
            xt = xt_raw.astype(jnp.float32)
            mu = jnp.mean(xt, axis=-1, keepdims=True)
            xc = xt - mu
            var = jnp.mean(xc * xc, axis=-1, keepdims=True)
            xt = (xc * jax.lax.rsqrt(var + ln_eps) * g_ref[...].astype(jnp.float32)
                  + bt_ref[...].astype(jnp.float32))
            xmm = xt.astype(jnp.bfloat16)
        else:
            xmm = xt_raw.astype(jnp.bfloat16)        # spikes {0,1} -> lossless bf16
        y = jnp.dot(xmm, w, preferred_element_type=jnp.float32) + bias   # f32 accumulation
        # LIF (mem_update): mem[0]=y0; mem[i]=mem[i-1]*decay*(1-spike[i-1])+y[i]; spike=(mem>thr)
        if t == 0:
            mem = y
        else:
            mem = mem * (decay * (1.0 - spike)) + y
        spike = (mem > thresh).astype(jnp.float32)
        o_ref[t] = spike.astype(o_ref.dtype)


def linear_lif(x_t, w_t, bias, *, ln_gamma=None, ln_beta=None, out_dtype=jnp.bfloat16,
               thresh=THRESH, decay=DECAY, ln_eps=1e-5, row_cap=512):
    """x_t: (T, M, K). Returns LIF spikes (T, M, Cout).
    Optionally applies LayerNorm over K in the matmul prologue (fused norm1/norm2)."""
    T_, M, K = x_t.shape
    K2, Cout = w_t.shape
    assert K == K2
    apply_ln = ln_gamma is not None

    # VMEM budget: shrink the row tile before it blows the scoped limit (matters on v7x's 64 MiB).
    x_bytes = x_t.dtype.itemsize
    o_bytes = jnp.dtype(out_dtype).itemsize
    w_bytes = w_t.dtype.itemsize
    cap = row_cap
    budget = 12 * 1024 * 1024
    while cap > 32:
        need = 2 * T_ * cap * (K * x_bytes + Cout * o_bytes) + 2 * K * Cout * w_bytes
        if need <= budget:
            break
        cap //= 2
    tm = _row_tile(M, cap)
    grid = (pl.cdiv(M, tm),)

    in_specs = [
        pl.BlockSpec((T_, tm, K), lambda i: (0, i, 0)),
        pl.BlockSpec((K, Cout), lambda i: (0, 0)),      # weight stays VMEM-resident across rows
        pl.BlockSpec((1, Cout), lambda i: (0, 0)),
    ]
    args = [x_t, w_t, bias.reshape(1, Cout).astype(jnp.float32)]
    if apply_ln:
        in_specs += [pl.BlockSpec((1, K), lambda i: (0, 0)),
                     pl.BlockSpec((1, K), lambda i: (0, 0))]
        args += [ln_gamma.reshape(1, K).astype(jnp.float32),
                 ln_beta.reshape(1, K).astype(jnp.float32)]

    return pl.pallas_call(
        functools.partial(_linear_lif_kernel, num_steps=T_, thresh=thresh, decay=decay,
                          apply_ln=apply_ln, ln_eps=ln_eps),
        out_shape=jax.ShapeDtypeStruct((T_, M, Cout), out_dtype),
        grid=grid,
        in_specs=in_specs,
        out_specs=pl.BlockSpec((T_, tm, Cout), lambda i: (0, i, 0)),
        compiler_params=pltpu.CompilerParams(dimension_semantics=("parallel",)),
    )(*args)


# ----------------------------------------------------------------------------
# Kernel 2: batched window attention (+ rel-pos bias, optional shift mask) + fused attn_lif.
# ----------------------------------------------------------------------------
def _window_attn_kernel(*refs, num_heads, head_dim, scale, has_mask, thresh, decay, num_steps):
    if has_mask:
        qkv_ref, bias_ref, mask_ref, o_ref = refs
    else:
        qkv_ref, bias_ref, o_ref = refs

    h, d = num_heads, head_dim
    C = h * d
    bias = bias_ref[...].astype(jnp.float32)                     # (h, N, N)
    if has_mask:
        mask = mask_ref[...].astype(jnp.float32)                 # (Wb, N, N)

    mem = None
    spike = None
    for t in range(num_steps):
        x16 = qkv_ref[t].astype(jnp.bfloat16)                    # (Wb, N, 3C) spikes {0,1}
        outs = []
        for hh in range(h):                                      # few heads -> unrolled
            q = x16[:, :, hh * d:(hh + 1) * d]                   # (Wb, N, d)
            k = x16[:, :, C + hh * d:C + (hh + 1) * d]
            v = x16[:, :, 2 * C + hh * d:2 * C + (hh + 1) * d]
            # s = (q @ k^T) * scale  (== (q*scale) @ k^T ; scale applied post-matmul keeps
            #     the spike operands exact in bf16)
            s = jax.lax.dot_general(q, k, (((2,), (2,)), ((0,), (0,))),
                                    preferred_element_type=jnp.float32)      # (Wb, N, N)
            s = s * scale + bias[hh][None, :, :]
            if has_mask:
                s = s + mask
            smax = jnp.max(s, axis=-1, keepdims=True)
            p = jnp.exp(s - smax)
            p = p * pl.reciprocal(jnp.sum(p, axis=-1, keepdims=True), approx=True)
            o = jax.lax.dot_general(p.astype(jnp.bfloat16), v, (((2,), (1,)), ((0,), (0,))),
                                    preferred_element_type=jnp.float32)      # (Wb, N, d)
            outs.append(o)
        y = jnp.concatenate(outs, axis=-1)                       # (Wb, N, C)  head merge in-VMEM
        # fused attn_lif over T
        if t == 0:
            mem = y
        else:
            mem = mem * (decay * (1.0 - spike)) + y
        spike = (mem > thresh).astype(jnp.float32)
        o_ref[t] = spike.astype(o_ref.dtype)


def window_attention_lif(qkv_t, rel_bias, mask, scale, num_heads, *, out_dtype=jnp.bfloat16,
                         thresh=THRESH, decay=DECAY, wb_cap=16):
    """qkv_t: (T, W_t, N, 3C) spikes (W_t = windows per time step).
    Returns attn_lif spikes (T, W_t, N, C)."""
    T_, W_t, N, C3 = qkv_t.shape
    C = C3 // 3
    d = C // num_heads
    has_mask = mask is not None

    in_specs = []
    args = [qkv_t, rel_bias.astype(jnp.float32)]
    if has_mask:
        nW = int(mask.shape[0])
        Wb = _largest_divisor(int(np.gcd(nW, W_t)), wb_cap)      # block never crosses an image
        nmb = nW // Wb
        if nmb == 1:
            mask_index = lambda g: (0, 0, 0)
        else:
            mask_index = lambda g, _nmb=nmb: (g % _nmb, 0, 0)
        mask_spec = pl.BlockSpec((Wb, N, N), mask_index)
    else:
        Wb = _largest_divisor(W_t, wb_cap)

    in_specs.append(pl.BlockSpec((T_, Wb, N, C3), lambda g: (0, g, 0, 0)))
    in_specs.append(pl.BlockSpec((num_heads, N, N), lambda g: (0, 0, 0)))
    if has_mask:
        in_specs.append(mask_spec)
        args.append(mask.astype(jnp.float32))

    return pl.pallas_call(
        functools.partial(_window_attn_kernel, num_heads=num_heads, head_dim=d, scale=scale,
                          has_mask=has_mask, thresh=thresh, decay=decay, num_steps=T_),
        out_shape=jax.ShapeDtypeStruct((T_, W_t, N, C), out_dtype),
        grid=(W_t // Wb,),
        in_specs=in_specs,
        out_specs=pl.BlockSpec((T_, Wb, N, C), lambda g: (0, g, 0, 0)),
        compiler_params=pltpu.CompilerParams(dimension_semantics=("parallel",)),
    )(*args)


# ----------------------------------------------------------------------------
# Kernel 3: fused residual add + DropPath (per-sample scale, lane-dense layout).
# ----------------------------------------------------------------------------
def _residual_kernel(s_ref, x_ref, sc_ref, o_ref):
    s = s_ref[...].astype(jnp.float32)                # (tm, lanes)
    x = x_ref[...].astype(jnp.float32)
    sc = sc_ref[...].astype(jnp.float32)              # (tm, 1) -> broadcast across lanes
    o_ref[...] = (s + sc * x).astype(o_ref.dtype)


def residual_drop_path_add(shortcut, branch, scale, *, row_cap=2048):
    """out[b] = shortcut[b] + scale[b] * branch[b];  scale: (B,)."""
    B, L, C = shortcut.shape
    per = L * C
    lanes = 128 if per % 128 == 0 else C               # lane-dense flattening when possible
    rps = per // lanes                                 # rows per sample
    rows = B * rps
    s2 = shortcut.reshape(rows, lanes)
    x2 = branch.reshape(rows, lanes)
    sc = jnp.repeat(scale.reshape(B).astype(jnp.float32), rps).reshape(rows, 1)
    tm = _row_tile(rows, row_cap)
    grid = (pl.cdiv(rows, tm),)
    out = pl.pallas_call(
        _residual_kernel,
        out_shape=jax.ShapeDtypeStruct((rows, lanes), shortcut.dtype),
        grid=grid,
        in_specs=[
            pl.BlockSpec((tm, lanes), lambda i: (i, 0)),
            pl.BlockSpec((tm, lanes), lambda i: (i, 0)),
            pl.BlockSpec((tm, 1), lambda i: (i, 0)),
        ],
        out_specs=pl.BlockSpec((tm, lanes), lambda i: (i, 0)),
        compiler_params=pltpu.CompilerParams(dimension_semantics=("parallel",)),
    )(s2, x2, sc)
    return out.reshape(B, L, C)


def drop_path_scale(key, batch, drop_prob, training):
    """Per-row DropPath scale (matches reference: one draw per row of B = T*batch)."""
    if drop_prob == 0.0 or not training:
        return jnp.ones((batch,), jnp.float32)
    keep_prob = 1.0 - drop_prob
    u = jax.random.uniform(key, (batch,), dtype=jnp.float32)
    keep = jnp.floor(keep_prob + u)                    # 1.0 w.p. keep_prob, else 0.0
    return keep / keep_prob


# ----------------------------------------------------------------------------
# Kernel 4: standalone LayerNorm (only used when window padding prevents LN fusion).
# ----------------------------------------------------------------------------
def _layernorm_kernel(x_ref, g_ref, b_ref, o_ref, *, eps):
    x = x_ref[...].astype(jnp.float32)
    mu = jnp.mean(x, axis=-1, keepdims=True)
    xc = x - mu
    var = jnp.mean(xc * xc, axis=-1, keepdims=True)
    y = xc * jax.lax.rsqrt(var + eps) * g_ref[...].astype(jnp.float32) + b_ref[...].astype(jnp.float32)
    o_ref[...] = y.astype(o_ref.dtype)


def layernorm(x2d, gamma, beta, *, eps=1e-5, row_cap=2048):
    M, C = x2d.shape
    tm = _row_tile(M, row_cap)
    grid = (pl.cdiv(M, tm),)
    return pl.pallas_call(
        functools.partial(_layernorm_kernel, eps=eps),
        out_shape=jax.ShapeDtypeStruct((M, C), x2d.dtype),
        grid=grid,
        in_specs=[
            pl.BlockSpec((tm, C), lambda i: (i, 0)),
            pl.BlockSpec((1, C), lambda i: (0, 0)),
            pl.BlockSpec((1, C), lambda i: (0, 0)),
        ],
        out_specs=pl.BlockSpec((tm, C), lambda i: (i, 0)),
        compiler_params=pltpu.CompilerParams(dimension_semantics=("parallel",)),
    )(x2d, gamma.reshape(1, C).astype(jnp.float32), beta.reshape(1, C).astype(jnp.float32))


# ----------------------------------------------------------------------------
# Module-level orchestration (layout plumbing in plain JAX).
# ----------------------------------------------------------------------------
def swin_transformer_block_forward(x, attn_mask, params, *, H, W, num_heads, window_size,
                                   shift_size=0, drop_path_prob=0.0, training=False,
                                   rng=None, num_steps=TIME_WINDOW):
    """x: (B, H*W, C) with B = T * batch (T outermost). Mirrors SwinTransformerBlock.forward."""
    B, L, C = x.shape
    assert L == H * W, "input feature has wrong size"
    assert B % num_steps == 0
    ws = window_size
    T_ = num_steps

    shortcut = x

    pad_r = (ws - W % ws) % ws
    pad_b = (ws - H % ws) % ws
    fuse_ln1 = (pad_r == 0 and pad_b == 0)   # LN commutes with roll/partition but not zero-pad

    if fuse_ln1:
        xn = x.reshape(B, H, W, C)
    else:
        xn = layernorm(x.reshape(B * L, C), params["norm1_g"], params["norm1_b"]).reshape(B, H, W, C)
        xn = jnp.pad(xn, ((0, 0), (0, pad_b), (0, pad_r), (0, 0)))
    Hp, Wp = H + pad_b, W + pad_r

    if shift_size > 0:
        xs = jnp.roll(xn, shift=(-shift_size, -shift_size), axis=(1, 2))
    else:
        xs = xn
        attn_mask = None

    nW = (Hp // ws) * (Wp // ws)
    N = ws * ws
    B_ = B * nW
    W_t = B_ // T_                      # windows per time step

    # window_partition -> (B_, N, C)
    xw = (xs.reshape(B, Hp // ws, ws, Wp // ws, ws, C)
            .transpose(0, 1, 3, 2, 4, 5)
            .reshape(B_, N, C))

    # fused q/k/v projection: one (C, 3C) matmul, optional LN prologue, LIF epilogue
    x_rows = xw.reshape(T_, W_t * N, C)
    qkv = linear_lif(
        x_rows, params["qkv_wt"], params["qkv_b"],
        ln_gamma=params["norm1_g"] if fuse_ln1 else None,
        ln_beta=params["norm1_b"] if fuse_ln1 else None,
        out_dtype=jnp.bfloat16)
    qkv = qkv.reshape(T_, W_t, N, 3 * C)

    # batched window attention + fused attn_lif
    d = C // num_heads
    scale = float(d) ** -0.5
    ao = window_attention_lif(qkv, params["rel_bias"], attn_mask, scale, num_heads,
                              out_dtype=jnp.bfloat16)                       # (T, W_t, N, C)

    # proj conv + folded BN + proj_lif (fused)
    po = linear_lif(ao.reshape(T_, W_t * N, C), params["proj_wt"], params["proj_b"],
                    out_dtype=jnp.bfloat16)
    po = po.reshape(B_, N, C)

    # window_reverse -> (B, Hp, Wp, C)
    xr = (po.reshape(B, Hp // ws, Wp // ws, ws, ws, C)
            .transpose(0, 1, 3, 2, 4, 5)
            .reshape(B, Hp, Wp, C))
    if shift_size > 0:
        xr = jnp.roll(xr, shift=(shift_size, shift_size), axis=(1, 2))
    if pad_r or pad_b:
        xr = xr[:, :H, :W, :]
    branch = xr.reshape(B, L, C)

    if rng is None:
        rng = jax.random.PRNGKey(0)
    k1, k2 = jax.random.split(rng)

    # x = shortcut + drop_path(attn_branch)
    s1 = drop_path_scale(k1, B, drop_path_prob, training)
    x1 = residual_drop_path_add(shortcut, branch, s1)

    # x = x + drop_path(mlp(norm2(x)))   -- norm2 fused into fc1, LIF fused into both linears
    h1 = linear_lif(x1.reshape(T_, (B // T_) * L, C), params["fc1_wt"], params["fc1_b"],
                    ln_gamma=params["norm2_g"], ln_beta=params["norm2_b"],
                    out_dtype=jnp.bfloat16)
    h2 = linear_lif(h1, params["fc2_wt"], params["fc2_b"], out_dtype=jnp.bfloat16)
    mlp_out = h2.reshape(B, L, C)

    s2 = drop_path_scale(k2, B, drop_path_prob, training)
    return residual_drop_path_add(x1, mlp_out, s2)


# ----------------------------------------------------------------------------
# Parameters (BN folded with running stats; relative position bias precomputed; bf16 weights).
# ----------------------------------------------------------------------------
def _relative_position_index(ws):
    coords = np.stack(np.meshgrid(np.arange(ws), np.arange(ws), indexing="ij"))  # (2, ws, ws)
    coords_flatten = coords.reshape(2, -1)
    rel = coords_flatten[:, :, None] - coords_flatten[:, None, :]                # (2, N, N)
    rel = rel.transpose(1, 2, 0).astype(np.int64)
    rel[:, :, 0] += ws - 1
    rel[:, :, 1] += ws - 1
    rel[:, :, 0] *= 2 * ws - 1
    return rel.sum(-1)                                                           # (N, N)


def init_swin_block_params(key, dim, num_heads, window_size, mlp_ratio=4.0, bn_eps=1e-5):
    C = dim
    hidden = int(dim * mlp_ratio)
    N = window_size * window_size
    ks = jax.random.split(key, 8)

    def w_init(k, shape, fan_in):
        return (jax.random.normal(k, shape, jnp.float32) / np.sqrt(fan_in)).astype(jnp.float32)

    def bn_identity(ch):
        return (jnp.ones((ch,), jnp.float32), jnp.zeros((ch,), jnp.float32),
                jnp.zeros((ch,), jnp.float32), jnp.ones((ch,), jnp.float32))

    def fold(w, b, bn):
        gamma, beta, mean, var = bn
        s = gamma / jnp.sqrt(var + bn_eps)
        w_eff = w * s[:, None]
        b0 = b if b is not None else jnp.zeros_like(mean)
        b_eff = (b0 - mean) * s + beta
        return jnp.transpose(w_eff), b_eff          # (Cin, Cout), (Cout,)

    q_wt, q_b = fold(w_init(ks[0], (C, C), C), None, bn_identity(C))
    k_wt, k_b = fold(w_init(ks[1], (C, C), C), None, bn_identity(C))
    v_wt, v_b = fold(w_init(ks[2], (C, C), C), None, bn_identity(C))
    proj_wt, proj_b = fold(w_init(ks[3], (C, C), C), jnp.zeros((C,), jnp.float32), bn_identity(C))
    fc1_wt, fc1_b = fold(w_init(ks[4], (hidden, C), C), jnp.zeros((hidden,), jnp.float32),
                         bn_identity(hidden))
    fc2_wt, fc2_b = fold(w_init(ks[5], (C, hidden), hidden), jnp.zeros((C,), jnp.float32),
                         bn_identity(C))

    rel_table = 0.02 * jax.random.normal(ks[6], ((2 * window_size - 1) ** 2, num_heads), jnp.float32)
    rel_index = _relative_position_index(window_size)
    rel_bias = jnp.take(rel_table, jnp.asarray(rel_index.reshape(-1)), axis=0)
    rel_bias = rel_bias.reshape(N, N, num_heads).transpose(2, 0, 1)              # (h, N, N)

    return dict(
        norm1_g=jnp.ones((C,), jnp.float32), norm1_b=jnp.zeros((C,), jnp.float32),
        norm2_g=jnp.ones((C,), jnp.float32), norm2_b=jnp.zeros((C,), jnp.float32),
        qkv_wt=jnp.concatenate([q_wt, k_wt, v_wt], axis=1).astype(jnp.bfloat16),  # (C, 3C)
        qkv_b=jnp.concatenate([q_b, k_b, v_b], axis=0),                            # (3C,)
        proj_wt=proj_wt.astype(jnp.bfloat16), proj_b=proj_b,
        fc1_wt=fc1_wt.astype(jnp.bfloat16), fc1_b=fc1_b,
        fc2_wt=fc2_wt.astype(jnp.bfloat16), fc2_b=fc2_b,
        rel_bias=rel_bias,
    )


def build_shift_attn_mask(H, W, window_size, shift_size):
    """Standard Swin shifted-window mask, (nW, N, N) with 0 / -100 entries (numpy, host-side)."""
    ws = window_size
    Hp = int(np.ceil(H / ws)) * ws
    Wp = int(np.ceil(W / ws)) * ws
    img_mask = np.zeros((Hp, Wp), np.float32)
    h_slices = (slice(0, -ws), slice(-ws, -shift_size), slice(-shift_size, None))
    w_slices = (slice(0, -ws), slice(-ws, -shift_size), slice(-shift_size, None))
    cnt = 0
    for hs in h_slices:
        for wsl in w_slices:
            img_mask[hs, wsl] = cnt
            cnt += 1
    mw = img_mask.reshape(Hp // ws, ws, Wp // ws, ws).transpose(0, 2, 1, 3).reshape(-1, ws * ws)
    diff = mw[:, None, :] - mw[:, :, None]
    return jnp.asarray(np.where(diff != 0, -100.0, 0.0).astype(np.float32))


# ----------------------------------------------------------------------------
# Self-test
# ----------------------------------------------------------------------------
if __name__ == "__main__":
    key = jax.random.PRNGKey(0)
    k_param, k_x, k_drop, k_a, k_b, k_s = jax.random.split(key, 6)

    T = TIME_WINDOW
    batch = 1
    B = T * batch
    C = 32
    num_heads = 2
    window_size = 4
    mlp_ratio = 4.0

    params = init_swin_block_params(k_param, C, num_heads, window_size, mlp_ratio)

    # sanity: fused residual + drop-path kernel against plain JAX (exact same math)
    H0 = W0 = 8
    a = jax.random.normal(k_a, (B, H0 * W0, C), jnp.float32)
    bb = jax.random.normal(k_b, (B, H0 * W0, C), jnp.float32)
    sc = jnp.array([1.0, 0.0, 2.0, 0.5], jnp.float32)
    got = jax.block_until_ready(residual_drop_path_add(a, bb, sc))
    assert bool(jnp.allclose(got, a + sc.reshape(B, 1, 1) * bb, atol=1e-5))

    # sanity: fused linear+LIF emits binary spikes
    xs = jax.random.normal(k_s, (T, 64, C), jnp.float32)
    spk = jax.block_until_ready(linear_lif(xs, params["qkv_wt"], params["qkv_b"]))
    assert bool(jnp.all((spk == 0) | (spk == 1)))

    # config 1: no shift, no padding -> LN fused into the qkv matmul, unmasked attention
    x1 = jax.random.normal(k_x, (B, H0 * W0, C), jnp.float32)
    out1 = swin_transformer_block_forward(
        x1, None, params, H=H0, W=W0, num_heads=num_heads, window_size=window_size,
        shift_size=0, drop_path_prob=0.25, training=True, rng=k_drop, num_steps=T)
    out1 = jax.block_until_ready(out1)
    assert out1.shape == (B, H0 * W0, C) and out1.dtype == x1.dtype
    assert bool(jnp.all(jnp.isfinite(out1)))

    # config 2: shifted windows + padding -> standalone LN, cyclic shift, masked attention
    H1 = W1 = 6
    shift = 2
    mask = build_shift_attn_mask(H1, W1, window_size, shift)
    x2 = jax.random.normal(k_x, (B, H1 * W1, C), jnp.float32)
    out2 = swin_transformer_block_forward(
        x2, mask, params, H=H1, W=W1, num_heads=num_heads, window_size=window_size,
        shift_size=shift, drop_path_prob=0.0, training=False, rng=k_drop, num_steps=T)
    out2 = jax.block_until_ready(out2)
    assert out2.shape == (B, H1 * W1, C)
    assert bool(jnp.all(jnp.isfinite(out2)))

    print("KERNEL_OK")
</pallas_src>

<mosaic_0001>
module attributes {stable_mosaic.version = 11 : i64} {
  func.func @_residual_kernel(%arg0: i32, %arg1: memref<64x128xf32, #tpu.memory_space<vmem>>, %arg2: memref<64x128xf32, #tpu.memory_space<vmem>>, %arg3: memref<64x1xf32, #tpu.memory_space<vmem>>, %arg4: memref<64x128xf32, #tpu.memory_space<vmem>>) attributes {dimension_semantics = [#tpu.dimension_semantics<parallel>], iteration_bounds = array<i64: 1>, scalar_prefetch = 0 : i64, scratch_operands = 0 : i64, tpu.core_type = #tpu.core_type<tc>, window_params = [{transform_indices = @transform_0, window_bounds = array<i64: 64, 128>}, {transform_indices = @transform_1, window_bounds = array<i64: 64, 128>}, {transform_indices = @transform_2, window_bounds = array<i64: 64, 1>}, {transform_indices = @transform_3, window_bounds = array<i64: 64, 128>}]} {
    %c0 = arith.constant 0 : index
    %c0_0 = arith.constant 0 : index
    %0 = vector.load %arg1[%c0, %c0_0] : memref<64x128xf32, #tpu.memory_space<vmem>>, vector<64x128xf32>
    %c0_1 = arith.constant 0 : index
    %c0_2 = arith.constant 0 : index
    %1 = vector.load %arg2[%c0_1, %c0_2] : memref<64x128xf32, #tpu.memory_space<vmem>>, vector<64x128xf32>
    %c0_3 = arith.constant 0 : index
    %c0_4 = arith.constant 0 : index
    %2 = vector.load %arg3[%c0_3, %c0_4] : memref<64x1xf32, #tpu.memory_space<vmem>>, vector<64x1xf32>
    %3 = vector.broadcast %2 : vector<64x1xf32> to vector<64x128xf32>
    %4 = arith.mulf %3, %1 : vector<64x128xf32>
    %5 = arith.addf %0, %4 : vector<64x128xf32>
    %c0_5 = arith.constant 0 : index
    %c0_6 = arith.constant 0 : index
    %6 = vector.load %arg4[%c0_5, %c0_6] : memref<64x128xf32, #tpu.memory_space<vmem>>, vector<64x128xf32>
    tpu.vector_store %arg4[%c0_5, %c0_6], %5 {strides = array<i32>} : memref<64x128xf32, #tpu.memory_space<vmem>>, vector<64x128xf32>,
    return
  }
  func.func @transform_0(%arg0: i32) -> (i32, i32) {
    %c0_i32 = arith.constant 0 : i32
    %c0_i32_0 = arith.constant 0 : i32
    return %arg0, %c0_i32 : i32, i32
  }
  func.func @transform_1(%arg0: i32) -> (i32, i32) {
    %c0_i32 = arith.constant 0 : i32
    %c0_i32_0 = arith.constant 0 : i32
    return %arg0, %c0_i32 : i32, i32
  }
  func.func @transform_2(%arg0: i32) -> (i32, i32) {
    %c0_i32 = arith.constant 0 : i32
    %c0_i32_0 = arith.constant 0 : i32
    return %arg0, %c0_i32 : i32, i32
  }
  func.func @transform_3(%arg0: i32) -> (i32, i32) {
    %c0_i32 = arith.constant 0 : i32
    %c0_i32_0 = arith.constant 0 : i32
    return %arg0, %c0_i32 : i32, i32
  }
}

</mosaic_0001>

<llo_original>
// kernel: tpu_custom_call.1
$region0: #{tpu_custom_call.1}
  #allocation0 [shape = 'u32[]', space=smem, size = 0x4, offset = 0x4, fixed_abs, tag = 'smem constant byte address 0x4 - core index']
  #allocation1 [shape = 'u32[144,128]{1,0:T(1,128)}', space=vmem, size = 0x12000, scoped, tag = 'internal scratch']
  %s0 = inlined_call_operand.vmem [shape: f32[64,128], index: 0, kind: input, shape index: {}]
  %s1 = inlined_call_operand.hbm [shape: f32[64,128], index: 1, kind: input, shape index: {}]
  %s2 = inlined_call_operand.vmem [shape: f32[64,1], index: 2, kind: input, shape index: {}]
  %s3 = inlined_call_operand.hbm [shape: f32[64,128], index: 3, kind: output, shape index: {}]
  %s4 = sld [smem:[#allocation0]]
  $region26: #{tpu_custom_call.1} parent=0
    _
  %s6 = ssub.s32 1, %s4
  %s7 = scalar_select 0, %s6, %s4
  $region1: #{tpu_custom_call.1} parent=0
    #allocation2 [shape = 'u8[32768]{0}', space=vmem, size = 0x8000, scoped, tag = 'input window, operand 1, single buffered']
    #allocation3 [shape = 's32[1]{0}', space=sflag, size = 0x4, scoped, tag = 'scoped memory for tpu_custom_call.1']
    #allocation4 [shape = 's32[1]{0}', space=sflag, size = 0x4, scoped, tag = 'scoped memory for tpu_custom_call.1']
    #allocation5 [shape = 'u8[32768]{0}', space=vmem, size = 0x8000, scoped, tag = 'output window, operand 0, single buffered']
    %8 = vsyncpa [#allocation3], 0
    %9 = vsyncpa [#allocation4], 0
    // Predicated region
    $region2: #{tpu_custom_call.1} parent=1 // pred_check
      _
    $region3: #{tpu_custom_call.1} parent=1 // pred_check_branch
      %11 = sbr.rel (0) target = $region5
    $region4: #{tpu_custom_call.1} parent=1 // pred_region
      _
    $region5: #{tpu_custom_call.1} parent=1 // pred_fallthru
      _
    // Predicated region
    $region6: #{tpu_custom_call.1} parent=1 // pred_check
      _
    $region7: #{tpu_custom_call.1} parent=1 // pred_check_branch
      %13 = sbr.rel (0) target = $region9
    $region8: #{tpu_custom_call.1} parent=1 // pred_region
      %s15 = ssub.s32 1024, 1024
      %16 = vsyncadd [#allocation3], %s15
      %s17 = sshll.u32 [#allocation2], 4
      %s18 = int_to_ptr.vmem [resolvable:$true] %s17
      %23 = dma.hbm_to_vmem [thread:$0]  %s1, 1024, %s18, [#allocation3], 128, 128, 8
    $region9: #{tpu_custom_call.1} parent=1 // pred_fallthru
      _
    // Predicated region
    $region10: #{tpu_custom_call.1} parent=1 // pred_check
      _
    $region11: #{tpu_custom_call.1} parent=1 // pred_check_branch
      %25 = sbr.rel (0) target = $region13
    $region12: #{tpu_custom_call.1} parent=1 // pred_region
      _
    $region13: #{tpu_custom_call.1} parent=1 // pred_fallthru
      _
    // Predicated region
    $region14: #{tpu_custom_call.1} parent=1 // pred_check
      _
    $region15: #{tpu_custom_call.1} parent=1 // pred_check_branch
      %27 = sbr.rel (0) target = $region17
    $region16: #{tpu_custom_call.1} parent=1 // pred_region
      %28 = dma.done [#allocation3], 1024
    $region17: #{tpu_custom_call.1} parent=1 // pred_fallthru
      _
    %v29 = vld [vmem:[%s0] sm:$0xff]
    %v30 = vld [vmem:[%s0 + $0x8] sm:$0xff]
    %v31 = vld [vmem:[%s0 + $0x10] sm:$0xff]
    %v32 = vld [vmem:[%s0 + $0x18] sm:$0xff]
    %v33 = vld [vmem:[%s0 + $0x20] sm:$0xff]
    %v34 = vld [vmem:[%s0 + $0x28] sm:$0xff]
    %v35 = vld [vmem:[%s0 + $0x30] sm:$0xff]
    %v36 = vld [vmem:[%s0 + $0x38] sm:$0xff]
    %v37 = vld [vmem:[#allocation2] sm:$0xff]
    %v38 = vld [vmem:[#allocation2 + $0x8] sm:$0xff]
    %v39 = vld [vmem:[#allocation2 + $0x10] sm:$0xff]
    %v40 = vld [vmem:[#allocation2 + $0x18] sm:$0xff]
    %v41 = vld [vmem:[#allocation2 + $0x20] sm:$0xff]
    %v42 = vld [vmem:[#allocation2 + $0x28] sm:$0xff]
    %v43 = vld [vmem:[#allocation2 + $0x30] sm:$0xff]
    %v44 = vld [vmem:[#allocation2 + $0x38] sm:$0xff]
    %v45 = vld [vmem:[%s2] sm:$0xff]
    %v46 = vld [vmem:[%s2 + $0x8] sm:$0xff]
    %v47 = vld [vmem:[%s2 + $0x10] sm:$0xff]
    %v48 = vld [vmem:[%s2 + $0x18] sm:$0xff]
    %v49 = vld [vmem:[%s2 + $0x20] sm:$0xff]
    %v50 = vld [vmem:[%s2 + $0x28] sm:$0xff]
    %v51 = vld [vmem:[%s2 + $0x30] sm:$0xff]
    %v52 = vld [vmem:[%s2 + $0x38] sm:$0xff]
    %54 = vset.pattern.permute.xlu0 0
    %55 = vperm.xlu0 %54, %v45
    %v56 = vpop.permute.xlu0 %55
    %59 = vset.pattern.permute.xlu0 0
    %60 = vperm.xlu0 %59, %v46
    %v61 = vpop.permute.xlu0 %60
    %64 = vset.pattern.permute.xlu0 0
    %65 = vperm.xlu0 %64, %v47
    %v66 = vpop.permute.xlu0 %65
    %69 = vset.pattern.permute.xlu0 0
    %70 = vperm.xlu0 %69, %v48
    %v71 = vpop.permute.xlu0 %70
    %74 = vset.pattern.permute.xlu0 0
    %75 = vperm.xlu0 %74, %v49
    %v76 = vpop.permute.xlu0 %75
    %79 = vset.pattern.permute.xlu0 0
    %80 = vperm.xlu0 %79, %v50
    %v81 = vpop.permute.xlu0 %80
    %84 = vset.pattern.permute.xlu0 0
    %85 = vperm.xlu0 %84, %v51
    %v86 = vpop.permute.xlu0 %85
    %89 = vset.pattern.permute.xlu0 0
    %90 = vperm.xlu0 %89, %v52
    %v91 = vpop.permute.xlu0 %90
    %v93 = vmul.f32 %v56, %v37
    %v94 = vmul.f32 %v61, %v38
    %v95 = vmul.f32 %v66, %v39
    %v96 = vmul.f32 %v71, %v40
    %v97 = vmul.f32 %v76, %v41
    %v98 = vmul.f32 %v81, %v42
    %v99 = vmul.f32 %v86, %v43
    %v100 = vmul.f32 %v91, %v44
    %v101 = vadd.f32 %v29, %v93
    %v102 = vadd.f32 %v30, %v94
    %v103 = vadd.f32 %v31, %v95
    %v104 = vadd.f32 %v32, %v96
    %v105 = vadd.f32 %v33, %v97
    %v106 = vadd.f32 %v34, %v98
    %v107 = vadd.f32 %v35, %v99
    %v108 = vadd.f32 %v36, %v100
    %109 = vst [vmem:[#allocation5] sm:$0xff] %v101
    %110 = vst [vmem:[#allocation5 + $0x8] sm:$0xff] %v102
    %111 = vst [vmem:[#allocation5 + $0x10] sm:$0xff] %v103
    %112 = vst [vmem:[#allocation5 + $0x18] sm:$0xff] %v104
    %113 = vst [vmem:[#allocation5 + $0x20] sm:$0xff] %v105
    %114 = vst [vmem:[#allocation5 + $0x28] sm:$0xff] %v106
    %115 = vst [vmem:[#allocation5 + $0x30] sm:$0xff] %v107
    %116 = vst [vmem:[#allocation5 + $0x38] sm:$0xff] %v108
    // Predicated region
    $region18: #{tpu_custom_call.1} parent=1 // pred_check
      _
    $region19: #{tpu_custom_call.1} parent=1 // pred_check_branch
      %118 = sbr.rel (0) target = $region21
    $region20: #{tpu_custom_call.1} parent=1 // pred_region
      %s120 = ssub.s32 1024, 1024
      %121 = vsyncadd [#allocation4], %s120
      %s122 = sshll.u32 [#allocation5], 4
      %s123 = int_to_ptr.vmem [resolvable:$true] %s122
      %128 = dma.vmem_to_hbm [thread:$0]  %s123, 1024, %s3, [#allocation4], 128, 128, 8
    $region21: #{tpu_custom_call.1} parent=1 // pred_fallthru
      _
    // Predicated region
    $region22: #{tpu_custom_call.1} parent=1 // pred_check
      _
    $region23: #{tpu_custom_call.1} parent=1 // pred_check_branch
      %130 = sbr.rel (0) target = $region25
    $region24: #{tpu_custom_call.1} parent=1 // pred_region
      %131 = dma.done [#allocation4], 1024
    $region25: #{tpu_custom_call.1} parent=1 // pred_fallthru
      _
    %132 = vsyncpa [#allocation3], 1
    %133 = vsyncpa [#allocation4], 1

</llo_original>
